<compile_context>
chip_gen: v7x
topology: tpu7x:2x2x1
jax: 0.10.0
libtpu: 0.0.40
codegen_flags: <defaults>
</compile_context>

<pallas_src>
import functools

import jax
import jax.numpy as jnp
from jax.experimental import pallas as pl
from jax.experimental.pallas import tpu as pltpu


_HALO = 128  # lane-aligned halo chunk; must cover the conv window overhang (2K-1)


def _round_up(x, m):
    return ((x + m - 1) // m) * m


def _expand_conv1d_kernel(xm_ref, xh_ref, w_ref, b_ref, o_ref, *, KW, TLO):
    # xm_ref: (C_in, TLO)        bf16  lane-aligned tile of zero-stuffed x
    # xh_ref: (C_in, 128)        bf16  right halo (next 128 lanes of same array)
    # w_ref : (C_half, KW*C_in)  bf16  parity-interleaved weights
    # b_ref : (C_half, TLO)      f32   parity-tiled bias (fetched once)
    # o_ref : (C_half, TLO)            already-interleaved output tile
    xt = jnp.concatenate([xm_ref[...], xh_ref[...]], axis=-1)   # (C_in, TLO+128)

    # im2col patch from static slices of the in-register tile (compiler emits
    # XLU lane rotates; equivalent to pltpu.roll, no misaligned ref loads).
    patch = jnp.concatenate([xt[:, j:j + TLO] for j in range(KW)], axis=0)

    # Single MXU dot -> output is already the pair->time interleaved tile.
    y = jnp.dot(w_ref[...], patch, preferred_element_type=jnp.float32)
    o_ref[...] = (y + b_ref[...]).astype(o_ref.dtype)


def expand_conv1d(x, w, b, *, tlo_max=1024, out_dtype=None):
    """Fused ExpandConv1d forward (Conv1d + channel-pair/time interleave)."""
    B, C_in, L = x.shape
    C_out, C_in_w, K = w.shape
    assert C_in_w == C_in
    assert C_out % 2 == 0, "ExpandConv1d requires an even number of channels"
    L_out = L - K + 1
    assert L_out >= 1
    C_half = C_out // 2
    KW = 2 * K                       # taps of the equivalent stride-2 transposed conv
    assert KW <= _HALO, "conv window must fit inside one halo chunk"
    L_exp = 2 * L_out                # expanded (interleaved) output length
    out_dtype = x.dtype if out_dtype is None else out_dtype

    # Output-time tiling: lane-dense, multiple of 256 (so tiles align with
    # conv positions), capped at tlo_max.
    TLO = min(_round_up(tlo_max, 256), _round_up(L_exp, 256))
    n_t = pl.cdiv(L_exp, TLO)
    L_exp_pad = n_t * TLO
    # One extra tile of zeros so the 128-lane halo block is always in range.
    L_up = (n_t + 1) * TLO

    # Zero-stuffed input (wrapper-side XLA, cheap): x_up[..., 2*t+1] = x[..., t].
    x_up = jnp.zeros((B, C_in, L_up), jnp.bfloat16)
    x_up = x_up.at[:, :, 1:2 * L + 1:2].set(x.astype(jnp.bfloat16))

    # Parity-interleaved weights: out[ch, c] = sum_{j,cin} w2[ch,cin,j] * x_up[cin, c+j]
    # with w2[ch,cin,2m+1] = w[2ch,cin,m]  (even output positions)
    #      w2[ch,cin,2m]   = w[2ch+1,cin,m] (odd output positions).
    w2 = jnp.zeros((C_half, C_in, KW), w.dtype)
    w2 = w2.at[:, :, 1::2].set(w[0::2])
    w2 = w2.at[:, :, 0::2].set(w[1::2])
    # Flatten to (C_half, KW*C_in) with rows ordered (tap j major, cin minor),
    # matching the kernel's patch layout.
    w2 = jnp.transpose(w2, (0, 2, 1)).reshape(C_half, KW * C_in)
    w2 = w2.astype(jnp.bfloat16)

    # Parity-tiled bias row: column c gets b[2*ch + (c % 2)].
    b_pair = jnp.stack([b[0::2], b[1::2]], axis=1)                  # (C_half, 2)
    b_tile = jnp.tile(b_pair, (1, TLO // 2)).astype(jnp.float32)    # (C_half, TLO)

    kernel = functools.partial(_expand_conv1d_kernel, KW=KW, TLO=TLO)

    # VMEM budget from actual tile sizes (double-buffered), generous headroom.
    blk_bytes = (2 * C_in * (TLO + _HALO) * 2          # x main + halo (bf16)
                 + C_half * KW * C_in * 2              # weights (bf16)
                 + C_half * TLO * 4                    # bias (f32)
                 + C_half * TLO * jnp.dtype(out_dtype).itemsize)
    vmem_limit = int(max(4 * 1024 * 1024, 8 * blk_bytes))

    out_pad = pl.pallas_call(
        kernel,
        out_shape=jax.ShapeDtypeStruct((B, C_half, L_exp_pad), out_dtype),
        grid_spec=pltpu.PrefetchScalarGridSpec(
            num_scalar_prefetch=0,
            grid=(B, n_t),
            in_specs=[
                # current tile of zero-stuffed x (lane-aligned)
                pl.BlockSpec((None, C_in, TLO), lambda bi, ti: (bi, 0, ti)),
                # 128-lane right halo of the SAME array (bounds VMEM, no full-L row)
                pl.BlockSpec((None, C_in, _HALO),
                             lambda bi, ti: (bi, 0, (ti + 1) * (TLO // _HALO))),
                # constant blocks: fetched once, reused across the grid
                pl.BlockSpec((C_half, KW * C_in), lambda bi, ti: (0, 0)),
                pl.BlockSpec((C_half, TLO), lambda bi, ti: (0, 0)),
            ],
            out_specs=pl.BlockSpec((None, C_half, TLO), lambda bi, ti: (bi, 0, ti)),
        ),
        compiler_params=pltpu.CompilerParams(
            dimension_semantics=("parallel", "parallel"),
            vmem_limit_bytes=vmem_limit,
        ),
    )(x_up, x_up, w2, b_tile)

    if L_exp_pad != L_exp:
        out_pad = out_pad[:, :, :L_exp]   # drop padded tail (bias-only garbage)
    return out_pad


def _reference(x, w, b):
    # plain-JAX f32 reference for sanity checking
    y = jax.lax.conv_general_dilated(
        x, w, window_strides=(1,), padding="VALID",
        dimension_numbers=("NCH", "OIH", "NCH"))
    y = y + b.reshape(1, -1, 1)
    B, C_out, L_out = y.shape
    y = y.reshape(B, C_out // 2, 2, L_out)
    y = jnp.transpose(y, (0, 1, 3, 2))
    return y.reshape(B, C_out // 2, 2 * L_out)


if __name__ == "__main__":
    # ExpandConv1d(in_channels=4, out_channels=8, kernel_size=3)
    B, C_in, L = 2, 4, 16
    C_out, K = 8, 3

    key = jax.random.PRNGKey(0)
    kx, kw, kb = jax.random.split(key, 3)

    x = jax.random.normal(kx, (B, C_in, L), dtype=jnp.float32)

    # deterministic Conv1d-style init: U(-bound, bound), bound = 1/sqrt(C_in*K)
    bound = 1.0 / (C_in * K) ** 0.5
    w = jax.random.uniform(kw, (C_out, C_in, K), jnp.float32, -bound, bound)
    b = jax.random.uniform(kb, (C_out,), jnp.float32, -bound, bound)

    out = expand_conv1d(x, w, b)
    out = jax.block_until_ready(out)

    ref = _reference(x, w, b)
    assert out.shape == (B, C_out // 2, 2 * (L - K + 1)), out.shape
    # bf16 operands inside the kernel -> loosened tolerance vs the f32 reference
    err = float(jnp.max(jnp.abs(out - ref)))
    assert err < 2e-2, f"max abs err {err}"

    print("KERNEL_OK")
</pallas_src>

<mosaic_0001>
module attributes {stable_mosaic.version = 11 : i64} {
  func.func @_expand_conv1d_kernel(%arg0: i32, %arg1: i32, %arg2: memref<1x4x256xbf16, #tpu.memory_space<vmem>>, %arg3: memref<1x4x128xbf16, #tpu.memory_space<vmem>>, %arg4: memref<4x24xbf16, #tpu.memory_space<vmem>>, %arg5: memref<4x256xf32, #tpu.memory_space<vmem>>, %arg6: memref<1x4x256xf32, #tpu.memory_space<vmem>>) attributes {dimension_semantics = [#tpu.dimension_semantics<parallel>, #tpu.dimension_semantics<parallel>], iteration_bounds = array<i64: 2, 1>, scalar_prefetch = 0 : i64, scratch_operands = 0 : i64, tpu.core_type = #tpu.core_type<tc>, window_params = [{transform_indices = @transform_0, window_bounds = array<i64: 1, 4, 256>}, {transform_indices = @transform_1, window_bounds = array<i64: 1, 4, 128>}, {pipeline_mode = #tpu.pipeline_mode<synchronous>, transform_indices = @transform_2, window_bounds = array<i64: 4, 24>}, {pipeline_mode = #tpu.pipeline_mode<synchronous>, transform_indices = @transform_3, window_bounds = array<i64: 4, 256>}, {transform_indices = @transform_4, window_bounds = array<i64: 1, 4, 256>}]} {
    %c0 = arith.constant 0 : index
    %c0_0 = arith.constant 0 : index
    %c0_1 = arith.constant 0 : index
    %0 = vector.load %arg2[%c0, %c0_0, %c0_1] : memref<1x4x256xbf16, #tpu.memory_space<vmem>>, vector<1x4x256xbf16>
    %1 = vector.shape_cast %0 : vector<1x4x256xbf16> to vector<4x256xbf16>
    %c0_2 = arith.constant 0 : index
    %c0_3 = arith.constant 0 : index
    %c0_4 = arith.constant 0 : index
    %2 = vector.load %arg3[%c0_2, %c0_3, %c0_4] : memref<1x4x128xbf16, #tpu.memory_space<vmem>>, vector<1x4x128xbf16>
    %3 = vector.shape_cast %2 : vector<1x4x128xbf16> to vector<4x128xbf16>
    %4 = tpu.concatenate %1, %3 in 1 : vector<4x256xbf16>, vector<4x128xbf16> -> vector<4x384xbf16>
    %5 = vector.extract_strided_slice %4 {offsets = [0, 0], sizes = [4, 256], strides = [1, 1]} : vector<4x384xbf16> to vector<4x256xbf16>
    %6 = vector.extract_strided_slice %4 {offsets = [0, 1], sizes = [4, 256], strides = [1, 1]} : vector<4x384xbf16> to vector<4x256xbf16>
    %7 = vector.extract_strided_slice %4 {offsets = [0, 2], sizes = [4, 256], strides = [1, 1]} : vector<4x384xbf16> to vector<4x256xbf16>
    %8 = vector.extract_strided_slice %4 {offsets = [0, 3], sizes = [4, 256], strides = [1, 1]} : vector<4x384xbf16> to vector<4x256xbf16>
    %9 = vector.extract_strided_slice %4 {offsets = [0, 4], sizes = [4, 256], strides = [1, 1]} : vector<4x384xbf16> to vector<4x256xbf16>
    %10 = vector.extract_strided_slice %4 {offsets = [0, 5], sizes = [4, 256], strides = [1, 1]} : vector<4x384xbf16> to vector<4x256xbf16>
    %11 = tpu.concatenate %5, %6, %7, %8, %9, %10 in 0 : vector<4x256xbf16>, vector<4x256xbf16>, vector<4x256xbf16>, vector<4x256xbf16>, vector<4x256xbf16>, vector<4x256xbf16> -> vector<24x256xbf16>
    %c0_5 = arith.constant 0 : index
    %c0_6 = arith.constant 0 : index
    %12 = vector.load %arg4[%c0_5, %c0_6] : memref<4x24xbf16, #tpu.memory_space<vmem>>, vector<4x24xbf16>
    %cst = arith.constant dense<0.000000e+00> : vector<4x256xf32>
    %13 = tpu.matmul %12, %11, %cst {dimension_numbers = #tpu.dot_dimension_numbers<[1], [0], [0], [1], [0, 0, 1, 1], [], []>} : vector<4x24xbf16>, vector<24x256xbf16>, vector<4x256xf32> -> vector<4x256xf32>
    %c0_7 = arith.constant 0 : index
    %c0_8 = arith.constant 0 : index
    %14 = vector.load %arg5[%c0_7, %c0_8] : memref<4x256xf32, #tpu.memory_space<vmem>>, vector<4x256xf32>
    %15 = arith.addf %13, %14 : vector<4x256xf32>
    %c0_9 = arith.constant 0 : index
    %c0_10 = arith.constant 0 : index
    %c0_11 = arith.constant 0 : index
    %16 = vector.load %arg6[%c0_9, %c0_10, %c0_11] : memref<1x4x256xf32, #tpu.memory_space<vmem>>, vector<1x4x256xf32>
    %17 = vector.shape_cast %16 : vector<1x4x256xf32> to vector<4x256xf32>
    %18 = vector.shape_cast %15 : vector<4x256xf32> to vector<1x4x256xf32>
    tpu.vector_store %arg6[%c0_9, %c0_10, %c0_11], %18 {strides = array<i32>} : memref<1x4x256xf32, #tpu.memory_space<vmem>>, vector<1x4x256xf32>,
    return
  }
  func.func @transform_0(%arg0: i32, %arg1: i32) -> (i32, i32, i32) {
    %c0_i32 = arith.constant 0 : i32
    %c0_i32_0 = arith.constant 0 : i32
    return %arg0, %c0_i32, %arg1 : i32, i32, i32
  }
  func.func @transform_1(%arg0: i32, %arg1: i32) -> (i32, i32, i32) {
    %c1_i32 = arith.constant 1 : i32
    %0 = arith.addi %arg1, %c1_i32 : i32
    %c2_i32 = arith.constant 2 : i32
    %1 = arith.muli %0, %c2_i32 : i32
    %c0_i32 = arith.constant 0 : i32
    %c0_i32_0 = arith.constant 0 : i32
    return %arg0, %c0_i32, %1 : i32, i32, i32
  }
  func.func @transform_2(%arg0: i32, %arg1: i32) -> (i32, i32) {
    %c0_i32 = arith.constant 0 : i32
    %c0_i32_0 = arith.constant 0 : i32
    %c0_i32_1 = arith.constant 0 : i32
    return %c0_i32, %c0_i32_0 : i32, i32
  }
  func.func @transform_3(%arg0: i32, %arg1: i32) -> (i32, i32) {
    %c0_i32 = arith.constant 0 : i32
    %c0_i32_0 = arith.constant 0 : i32
    %c0_i32_1 = arith.constant 0 : i32
    return %c0_i32, %c0_i32_0 : i32, i32
  }
  func.func @transform_4(%arg0: i32, %arg1: i32) -> (i32, i32, i32) {
    %c0_i32 = arith.constant 0 : i32
    %c0_i32_0 = arith.constant 0 : i32
    return %arg0, %c0_i32, %arg1 : i32, i32, i32
  }
}

</mosaic_0001>

<llo_original>
// kernel: tpu_custom_call.1
$region0: #{tpu_custom_call.1}
  #allocation0 [shape = 'u32[]', space=smem, size = 0x4, offset = 0x4, fixed_abs, tag = 'smem constant byte address 0x4 - core index']
  #allocation1 [shape = 'u32[144,128]{1,0:T(1,128)}', space=vmem, size = 0x12000, scoped, tag = 'internal scratch']
  %s0 = inlined_call_operand.hbm [shape: bf16[2,4,512], index: 0, kind: input, shape index: {}]
  %s1 = inlined_call_operand.hbm [shape: bf16[2,4,512], index: 1, kind: input, shape index: {}]
  %s2 = inlined_call_operand.vmem [shape: bf16[4,24], index: 2, kind: input, shape index: {}]
  %s3 = inlined_call_operand.vmem [shape: f32[4,256], index: 3, kind: input, shape index: {}]
  %s4 = inlined_call_operand.hbm [shape: f32[2,4,256], index: 4, kind: output, shape index: {}]
  %s5 = sld [smem:[#allocation0]]
  $region57: #{tpu_custom_call.1} parent=0
    _
  %s7 = ssub.s32 1, %s5
  %s8 = scalar_select 0, %s7, %s5
  $region1: #{tpu_custom_call.1} parent=0
    #allocation2 [shape = 'u8[4096]{0}', space=vmem, size = 0x1000, scoped, tag = 'input window, operand 0']
    #allocation3 [shape = 's32[2]{0}', space=sflag, size = 0x8, scoped, tag = 'scoped memory for tpu_custom_call.1']
    #allocation4 [shape = 's32[2]{0}', space=sflag, size = 0x8, scoped, tag = 'scoped memory for tpu_custom_call.1']
    #allocation5 [shape = 'u8[2048]{0}', space=vmem, size = 0x800, scoped, tag = 'input window, operand 1']
    #allocation6 [shape = 's32[2]{0}', space=sflag, size = 0x8, scoped, tag = 'scoped memory for tpu_custom_call.1']
    #allocation7 [shape = 'u8[8192]{0}', space=vmem, size = 0x2000, scoped, tag = 'output window, operand 0']
    %9 = vsyncpa [#allocation3], 0
    %s10 = scalar_lea.sflag [#allocation3], 1
    %11 = vsyncpa %s10, 0
    %12 = vsyncpa [#allocation6], 0
    %s13 = scalar_lea.sflag [#allocation6], 1
    %14 = vsyncpa %s13, 0
    %15 = vsyncpa [#allocation4], 0
    %s16 = scalar_lea.sflag [#allocation4], 1
    %17 = vsyncpa %s16, 0
    loop: start=0, step=1, limit=4
    $region2: #{tpu_custom_call.1} parent=1 // loop_pre_header
      _
    $region3: #{tpu_custom_call.1} parent=1 // loop_header
      %s19 = sphi 0, %s23
      %p20 = scmp.ge.s32.totalorder %s19, 4
      %s26 = sphi 0, %s38
      %s27 = sphi 0, %s34
      %s28 = sphi 0, %s26
      %s29 = sphi 0, %s27
      %s30 = sphi 0, %s28
      %s31 = sphi 0, %s29
      %s43 = sphi 0, %s45
      %s46 = sphi 0, %s43
      %s47 = sphi 0, %s46
      %s63 = sphi 0, %s47
      %s75 = sphi 0, %s77
      %s78 = sphi 0, %s75
      %s79 = sphi 0, %s78
      %s95 = sphi 0, %s79
      %s99 = sphi 0, %s99
      %s101 = sphi 0, %s99
      %s102 = sphi 0, %s101
      %s116 = sphi 0, %s102
      %s120 = sphi 0, %s120
      %s122 = sphi 0, %s120
      %s123 = sphi 0, %s122
      %s137 = sphi 0, %s123
      %s145 = sphi 0, %s147
      %s148 = sphi 0, %s145
      %s149 = sphi 0, %s148
      %s165 = sphi 0, %s149
    $region4: #{tpu_custom_call.1} parent=1 // loop_header_branch
      %22 = sbr.rel (%p20) target = $region8
    $region5: #{tpu_custom_call.1} parent=1 // loop_body
      %s24 = ssub.s32 %s19, 1
      %s25 = ssub.s32 %s19, 2
      %s32 = sadd.s32 1, %s27
      %p33 = scmp.ge.s32.totalorder %s32, 1
      %s34 = scalar_select %p33, 0, %s32
      %s35 = sadd.s32 1, %s26
      %s36 = scalar_select %p33, %s35, %s26
      %p37 = scmp.ge.s32.totalorder %s36, 2
      %s38 = scalar_select %p37, 0, %s36
      %s39 = ssub.s32 %s26, %s38
      %s40 = ssub.s32 %s27, %s34
      %s41 = sor.u32 %s39, %s40
      %p42 = scmp.eq.s32.totalorder %s41, 0
      %s44 = sadd.s32 %s43, 1
      %s45 = scalar_select %p42, %s43, %s44
      %p48 = pneg %p42
      %p49 = scmp.eq.s32.totalorder %s19, 1
      %p50 = por %p48, %p49
      %p51 = scmp.ne.s32.totalorder %s43, %s46
      %p52 = scmp.eq.s32.totalorder %s19, 0
      %p53 = por %p51, %p52
      %p54 = scmp.ne.s32.totalorder %s43, %s46
      %p55 = scmp.eq.s32.totalorder %s24, 1
      %p56 = por %p54, %p55
      %p57 = scmp.ne.s32.totalorder %s46, %s47
      %p58 = scmp.eq.s32.totalorder %s24, 0
      %p59 = por %p57, %p58
      %p60 = scmp.ne.s32.totalorder %s46, %s47
      %p61 = scmp.eq.s32.totalorder %s25, 1
      %p62 = por %p60, %p61
      %p64 = scmp.ne.s32.totalorder %s47, %s63
      %p65 = scmp.eq.s32.totalorder %s25, 0
      %p66 = por %p64, %p65
      %s67 = sadd.s32 %s27, 1
      %s68 = smul.u32 %s67, 2
      %s69 = sadd.s32 %s34, 1
      %s70 = smul.u32 %s69, 2
      %s71 = ssub.s32 %s26, %s38
      %s72 = ssub.s32 %s68, %s70
      %s73 = sor.u32 %s71, %s72
      %p74 = scmp.eq.s32.totalorder %s73, 0
      %s76 = sadd.s32 %s75, 1
      %s77 = scalar_select %p74, %s75, %s76
      %p80 = pneg %p74
      %p81 = scmp.eq.s32.totalorder %s19, 1
      %p82 = por %p80, %p81
      %p83 = scmp.ne.s32.totalorder %s75, %s78
      %p84 = scmp.eq.s32.totalorder %s19, 0
      %p85 = por %p83, %p84
      %p86 = scmp.ne.s32.totalorder %s75, %s78
      %p87 = scmp.eq.s32.totalorder %s24, 1
      %p88 = por %p86, %p87
      %p89 = scmp.ne.s32.totalorder %s78, %s79
      %p90 = scmp.eq.s32.totalorder %s24, 0
      %p91 = por %p89, %p90
      %p92 = scmp.ne.s32.totalorder %s78, %s79
      %p93 = scmp.eq.s32.totalorder %s25, 1
      %p94 = por %p92, %p93
      %p96 = scmp.ne.s32.totalorder %s79, %s95
      %p97 = scmp.eq.s32.totalorder %s25, 0
      %p98 = por %p96, %p97
      %s100 = sadd.s32 %s99, 1
      %p103 = scmp.eq.s32.totalorder %s19, 1
      %p104 = scmp.ne.s32.totalorder %s99, %s101
      %p105 = scmp.eq.s32.totalorder %s19, 0
      %p106 = por %p104, %p105
      %p107 = scmp.ne.s32.totalorder %s99, %s101
      %p108 = scmp.eq.s32.totalorder %s24, 1
      %p109 = por %p107, %p108
      %p110 = scmp.ne.s32.totalorder %s101, %s102
      %p111 = scmp.eq.s32.totalorder %s24, 0
      %p112 = por %p110, %p111
      %p113 = scmp.ne.s32.totalorder %s101, %s102
      %p114 = scmp.eq.s32.totalorder %s25, 1
      %p115 = por %p113, %p114
      %p117 = scmp.ne.s32.totalorder %s102, %s116
      %p118 = scmp.eq.s32.totalorder %s25, 0
      %p119 = por %p117, %p118
      %s121 = sadd.s32 %s120, 1
      %p124 = scmp.eq.s32.totalorder %s19, 1
      %p125 = scmp.ne.s32.totalorder %s120, %s122
      %p126 = scmp.eq.s32.totalorder %s19, 0
      %p127 = por %p125, %p126
      %p128 = scmp.ne.s32.totalorder %s120, %s122
      %p129 = scmp.eq.s32.totalorder %s24, 1
      %p130 = por %p128, %p129
      %p131 = scmp.ne.s32.totalorder %s122, %s123
      %p132 = scmp.eq.s32.totalorder %s24, 0
      %p133 = por %p131, %p132
      %p134 = scmp.ne.s32.totalorder %s122, %s123
      %p135 = scmp.eq.s32.totalorder %s25, 1
      %p136 = por %p134, %p135
      %p138 = scmp.ne.s32.totalorder %s123, %s137
      %p139 = scmp.eq.s32.totalorder %s25, 0
      %p140 = por %p138, %p139
      %s141 = ssub.s32 %s26, %s38
      %s142 = ssub.s32 %s27, %s34
      %s143 = sor.u32 %s141, %s142
      %p144 = scmp.eq.s32.totalorder %s143, 0
      %s146 = sadd.s32 %s145, 1
      %s147 = scalar_select %p144, %s145, %s146
      %p150 = pneg %p144
      %p151 = scmp.eq.s32.totalorder %s19, 1
      %p152 = por %p150, %p151
      %p153 = scmp.ne.s32.totalorder %s145, %s148
      %p154 = scmp.eq.s32.totalorder %s19, 0
      %p155 = por %p153, %p154
      %p156 = scmp.ne.s32.totalorder %s145, %s148
      %p157 = scmp.eq.s32.totalorder %s24, 1
      %p158 = por %p156, %p157
      %p159 = scmp.ne.s32.totalorder %s148, %s149
      %p160 = scmp.eq.s32.totalorder %s24, 0
      %p161 = por %p159, %p160
      %p162 = scmp.ne.s32.totalorder %s148, %s149
      %p163 = scmp.eq.s32.totalorder %s25, 1
      %p164 = por %p162, %p163
      %p166 = scmp.ne.s32.totalorder %s149, %s165
      %p167 = scmp.eq.s32.totalorder %s25, 0
      %p168 = por %p166, %p167
      %p169 = scmp.le.s32.totalorder 1, %s19
      %p170 = scmp.lt.s32.totalorder %s19, 3
      %p171 = pnand %p169, %p170
      %p172 = pneg %p171
      // Predicated region
      $region9: #{tpu_custom_call.1} parent=5 // pred_check
        _
      $region10: #{tpu_custom_call.1} parent=5 // pred_check_branch
        %174 = sbr.rel (%p171) target = $region12
      $region11: #{tpu_custom_call.1} parent=5 // pred_region
        %s175 = ssub.s32 %s19, 1
        // Predicated region
        $region13: #{tpu_custom_call.1} parent=11 // pred_check
          %p176 = pneg %p112
        $region14: #{tpu_custom_call.1} parent=11 // pred_check_branch
          %178 = sbr.rel (%p176) target = $region16
        $region15: #{tpu_custom_call.1} parent=11 // pred_region
          _
        $region16: #{tpu_custom_call.1} parent=11 // pred_fallthru
          _
        // Predicated region
        $region17: #{tpu_custom_call.1} parent=11 // pred_check
          %p179 = pneg %p133
        $region18: #{tpu_custom_call.1} parent=11 // pred_check_branch
          %181 = sbr.rel (%p179) target = $region20
        $region19: #{tpu_custom_call.1} parent=11 // pred_region
          _
        $region20: #{tpu_custom_call.1} parent=11 // pred_fallthru
          _
      $region12: #{tpu_custom_call.1} parent=5 // pred_fallthru
        _
      %p182 = scmp.lt.s32.totalorder %s19, 2
      // Predicated region
      $region21: #{tpu_custom_call.1} parent=5 // pred_check
        %p183 = pneg %p182
      $region22: #{tpu_custom_call.1} parent=5 // pred_check_branch
        %185 = sbr.rel (%p183) target = $region24
      $region23: #{tpu_custom_call.1} parent=5 // pred_region
        // Predicated region
        $region25: #{tpu_custom_call.1} parent=23 // pred_check
          %p186 = pneg %p53
        $region26: #{tpu_custom_call.1} parent=23 // pred_check_branch
          %188 = sbr.rel (%p186) target = $region28
        $region27: #{tpu_custom_call.1} parent=23 // pred_region
          %s189 = sand.u32 %s43, 1
          %s190 = scalar_lea.sflag [#allocation3], %s189
          %s191 = sand.u32 %s43, 1
          %s192 = smul.addr %s191, 4
          %s193 = scalar_lea.vmem [#allocation2], %s192
          %s194 = smul.u32 2, %s27
          %s196 = ssub.s32 64, 64
          %197 = vsyncadd %s190, %s196
          %s198 = smul.addr %s26, 4
          %s199 = sadd.s32 %s194, %s198
          %s200 = smul.addr %s199, 32
          %s201 = scalar_lea.hbm %s0, %s200
          %s203 = sshll.u32 %s193, 4
          %s204 = int_to_ptr.vmem [resolvable:$true] %s203
          %206 = dma.hbm_to_vmem [thread:$0]  %s201, 64, %s204, %s190
        $region28: #{tpu_custom_call.1} parent=23 // pred_fallthru
          _
        // Predicated region
        $region29: #{tpu_custom_call.1} parent=23 // pred_check
          %p207 = pneg %p85
        $region30: #{tpu_custom_call.1} parent=23 // pred_check_branch
          %209 = sbr.rel (%p207) target = $region32
        $region31: #{tpu_custom_call.1} parent=23 // pred_region
          %s210 = sand.u32 %s75, 1
          %s211 = scalar_lea.sflag [#allocation6], %s210
          %s212 = sand.u32 %s75, 1
          %s213 = smul.addr %s212, 2
          %s214 = scalar_lea.vmem [#allocation5], %s213
          %s215 = sadd.s32 %s27, 1
          %s216 = smul.u32 %s215, 2
          %s218 = ssub.s32 32, 32
          %219 = vsyncadd %s211, %s218
          %s220 = smul.addr %s26, 4
          %s221 = sadd.s32 %s216, %s220
          %s222 = smul.addr %s221, 32
          %s223 = scalar_lea.hbm %s1, %s222
          %s225 = sshll.u32 %s214, 4
          %s226 = int_to_ptr.vmem [resolvable:$true] %s225
          %228 = dma.hbm_to_vmem [thread:$0]  %s223, 32, %s226, %s211
        $region32: #{tpu_custom_call.1} parent=23 // pred_fallthru
          _
      $region24: #{tpu_custom_call.1} parent=5 // pred_fallthru
        _
      %p229 = scmp.le.s32.totalorder 1, %s19
      %p230 = scmp.lt.s32.totalorder %s19, 3
      %p231 = pnand %p229, %p230
      %p232 = pneg %p231
      // Predicated region
      $region33: #{tpu_custom_call.1} parent=5 // pred_check
        _
      $region34: #{tpu_custom_call.1} parent=5 // pred_check_branch
        %234 = sbr.rel (%p231) target = $region36
      $region35: #{tpu_custom_call.1} parent=5 // pred_region
        %s235 = ssub.s32 %s19, 1
        %s236 = sand.u32 %s46, 1
        %s237 = scalar_lea.sflag [#allocation3], %s236
        %s238 = sand.u32 %s46, 1
        %s239 = smul.addr %s238, 4
        %s240 = scalar_lea.vmem [#allocation2], %s239
        // Predicated region
        $region37: #{tpu_custom_call.1} parent=35 // pred_check
          %p241 = pneg %p59
        $region38: #{tpu_custom_call.1} parent=35 // pred_check_branch
          %243 = sbr.rel (%p241) target = $region40
        $region39: #{tpu_custom_call.1} parent=35 // pred_region
          %244 = dma.done %s237, 64
        $region40: #{tpu_custom_call.1} parent=35 // pred_fallthru
          _
        %s245 = sand.u32 %s78, 1
        %s246 = scalar_lea.sflag [#allocation6], %s245
        %s247 = sand.u32 %s78, 1
        %s248 = smul.addr %s247, 2
        %s249 = scalar_lea.vmem [#allocation5], %s248
        // Predicated region
        $region41: #{tpu_custom_call.1} parent=35 // pred_check
          %p250 = pneg %p91
        $region42: #{tpu_custom_call.1} parent=35 // pred_check_branch
          %252 = sbr.rel (%p250) target = $region44
        $region43: #{tpu_custom_call.1} parent=35 // pred_region
          %253 = dma.done %s246, 32
        $region44: #{tpu_custom_call.1} parent=35 // pred_fallthru
          _
        %s254 = sand.u32 %s46, 1
        %s255 = scalar_lea.sflag [#allocation3], %s254
        %s256 = sand.u32 %s46, 1
        %s257 = smul.addr %s256, 4
        %s258 = scalar_lea.vmem [#allocation2], %s257
        %p259 = pneg %p59
        %p260 = pneg %p56
        %s261 = sand.u32 %s78, 1
        %s262 = scalar_lea.sflag [#allocation6], %s261
        %s263 = sand.u32 %s78, 1
        %s264 = smul.addr %s263, 2
        %s265 = scalar_lea.vmem [#allocation5], %s264
        %p266 = pneg %p91
        %p267 = pneg %p88
        %p268 = pneg %p112
        %p269 = pneg %p109
        %p270 = pneg %p133
        %p271 = pneg %p130
        %p272 = pneg %p161
        %p273 = pneg %p158
        %s274 = sand.u32 %s148, 1
        %s275 = scalar_lea.sflag [#allocation4], %s274
        %s276 = sand.u32 %s148, 1
        %s277 = smul.addr %s276, 8
        %s278 = scalar_lea.vmem [#allocation7], %s277
        %s279 = smul.u32 2, %s29
        %s280 = sadd.s32 %s29, 1
        %s281 = smul.u32 %s280, 2
        %s282 = smul.u32 2, %s29
        %v284 = vld [vmem:[%s240] sm:$0xf]
        %v285 = vld [vmem:[%s249] sm:$0x3]
        %v288 = vunpack.c.l.s4 1983009808
        %v289 = vunpack.c.0.s8 %v288
        %v290 = vlaneseq
        %v291 = vshrl.u32 %v290, 7
        %v292 = vsub.s32 %v289, %v291
        %v293 = vrot.slane %v284, %v292
        %v294 = vcombine.high %v293, %v293
        %v296 = vrot.slane %v293, 6
        %v297 = vrot.slane %v294, 6
        %v298 = vrot.slane %v285, 6
        %299 = vrot.lane.b32.xlu0 %v296, 127
        %v300 = vpop.permute.xlu0 %299
        %301 = vrot.lane.b32.xlu0 %v297, 127
        %v302 = vpop.permute.xlu0 %301
        %303 = vrot.lane.b32.xlu0 %v298, 127
        %v304 = vpop.permute.xlu0 %303
        %vm305 = vcmask 1039360
        %v306 = vsel %vm305, %v300, %v302
        %v307 = vsel %vm305, %v302, %v304
        %v308 = vrot.slane %v293, 4
        %v309 = vrot.slane %v294, 4
        %v310 = vrot.slane %v285, 4
        %311 = vrot.lane.b32.xlu0 %v308, 126
        %v312 = vpop.permute.xlu0 %311
        %313 = vrot.lane.b32.xlu0 %v309, 126
        %v314 = vpop.permute.xlu0 %313
        %315 = vrot.lane.b32.xlu0 %v310, 126
        %v316 = vpop.permute.xlu0 %315
        %vm317 = vcmask 1031168
        %v318 = vsel %vm317, %v312, %v314
        %v319 = vsel %vm317, %v314, %v316
        %v320 = vrot.slane %v293, 2
        %v321 = vrot.slane %v294, 2
        %v322 = vrot.slane %v285, 2
        %323 = vrot.lane.b32.xlu0 %v320, 125
        %v324 = vpop.permute.xlu0 %323
        %325 = vrot.lane.b32.xlu0 %v321, 125
        %v326 = vpop.permute.xlu0 %325
        %327 = vrot.lane.b32.xlu0 %v322, 125
        %v328 = vpop.permute.xlu0 %327
        %vm329 = vcmask 1022976
        %v330 = vsel %vm329, %v324, %v326
        %v331 = vsel %vm329, %v326, %v328
        %332 = vrot.lane.b32.xlu0 %v293, 124
        %v333 = vpop.permute.xlu0 %332
        %334 = vrot.lane.b32.xlu0 %v294, 124
        %v335 = vpop.permute.xlu0 %334
        %336 = vrot.lane.b32.xlu0 %v285, 124
        %v337 = vpop.permute.xlu0 %336
        %vm338 = vcmask 1014784
        %v339 = vsel %vm338, %v333, %v335
        %v340 = vsel %vm338, %v335, %v337
        %341 = vrot.lane.b32.xlu0 %v296, 123
        %v342 = vpop.permute.xlu0 %341
        %343 = vrot.lane.b32.xlu0 %v297, 123
        %v344 = vpop.permute.xlu0 %343
        %345 = vrot.lane.b32.xlu0 %v298, 123
        %v346 = vpop.permute.xlu0 %345
        %vm347 = vcmask 1006592
        %v348 = vsel %vm347, %v342, %v344
        %v349 = vsel %vm347, %v344, %v346
        %vm350 = vcmask 1041408
        %v353 = vsel %vm350, %v293, %v306
        %v356 = vsel %vm350, %v294, %v307
        %vm357 = vcmask 1043456
        %v359 = vsel %vm357, %v353, %v318
        %v361 = vsel %vm357, %v356, %v319
        %vm362 = vcmask 1045504
        %v364 = vsel %vm362, %v359, %v330
        %v367 = vsel %vm362, %v361, %v331
        %v371 = vsel %vm350, %v339, %v348
        %v374 = vsel %vm350, %v340, %v349
        %v375 = vld [vmem:[%s2] sm:$0x3]
        %v376 = vld [vmem:[%s3] sm:$0xff]
        %v378 = vcombine.high %v376, %v376
        %vm380 = vcmask 195584
        %v382 = vsel %vm380, %v375, 0
        %v384 = vsel %vm357, %v371, 0
        %v386 = vsel %vm357, %v374, 0
        %388 = vmatprep.subr.bf16.mxu0 %v367
        %389 = vmatpush1.bf16.msra.mxu0 %v364
        %390 = vmatprep.subr.bf16.mxu0 %v386
        %391 = vmatpush1.bf16.msra.mxu0 %v384
        %392 = vmatprep.subr.bf16.mxu0 0
        %393 = vmatpush1.bf16.msra.mxu0 0
        %394 = vmatprep.subr.bf16.mxu0 0
        %395 = vmatpush1.bf16.msra.mxu0 0
        %396 = vmatprep.subr.bf16.mxu0 0
        %397 = vmatpush1.bf16.msra.mxu0 0
        %398 = vmatprep.subr.bf16.mxu0 0
        %399 = vmatpush1.bf16.msra.mxu0 0
        %400 = vmatprep.subr.bf16.mxu0 0
        %401 = vmatpush1.bf16.msra.mxu0 0
        %402 = vmatprep.subr.bf16.mxu0 0
        %403 = vmatpush1.bf16.msra.mxu0 0
        %404 = vmatprep.subr.bf16.mxu0 0
        %405 = vmatpush1.bf16.msra.mxu0 0
        %406 = vmatprep.subr.bf16.mxu0 0
        %407 = vmatpush1.bf16.msra.mxu0 0
        %408 = vmatprep.subr.bf16.mxu0 0
        %409 = vmatpush1.bf16.msra.mxu0 0
        %410 = vmatprep.subr.bf16.mxu0 0
        %411 = vmatpush1.bf16.msra.mxu0 0
        %412 = vmatprep.subr.bf16.mxu0 0
        %413 = vmatpush1.bf16.msra.mxu0 0
        %414 = vmatprep.subr.bf16.mxu0 0
        %415 = vmatpush1.bf16.msra.mxu0 0
        %416 = vmatprep.subr.bf16.mxu0 0
        %417 = vmatpush1.bf16.msra.mxu0 0
        %418 = vmatprep.subr.bf16.mxu0 0
        %419 = vmatpush1.bf16.msra.mxu0 0
        %420 = vmatprep.mubr.bf16.mxu0 0
        %421 = vmatmul.mubr.bf16.gmra.mrb[0].mxu0 %v382
        %v422 = vpop.f32.mrb[0].mxu0
        %v423 = vadd.f32 %v376, %v422
        %v424 = vpop.f32.mrb[0].mxu0
        %v425 = vadd.f32 %v378, %v424
        %v426 = vpop.f32.mrb[0].mxu0
        %v427 = vpop.f32.mrb[0].mxu0
        %428 = vdwg.mxu0
        %v431 = vcombine.low %v423, %v425
        %433 = vst [vmem:[%s278] sm:$0xff] %v431
        %s434 = sand.u32 %s148, 1
        %s435 = scalar_lea.sflag [#allocation4], %s434
        %s436 = sand.u32 %s148, 1
        %s437 = smul.addr %s436, 8
        %s438 = scalar_lea.vmem [#allocation7], %s437
        // Predicated region
        $region45: #{tpu_custom_call.1} parent=35 // pred_check
          %p439 = pneg %p158
        $region46: #{tpu_custom_call.1} parent=35 // pred_check_branch
          %441 = sbr.rel (%p439) target = $region48
        $region47: #{tpu_custom_call.1} parent=35 // pred_region
          %s442 = smul.u32 2, %s29
          %s444 = ssub.s32 128, 128
          %445 = vsyncadd %s435, %s444
          %s446 = smul.addr %s28, 2
          %s447 = sadd.s32 %s442, %s446
          %s448 = smul.addr %s447, 64
          %s449 = scalar_lea.hbm %s4, %s448
          %s451 = sshll.u32 %s438, 4
          %s452 = int_to_ptr.vmem [resolvable:$true] %s451
          %454 = dma.vmem_to_hbm [thread:$0]  %s452, 128, %s449, %s435
        $region48: #{tpu_custom_call.1} parent=35 // pred_fallthru
          _
      $region36: #{tpu_custom_call.1} parent=5 // pred_fallthru
        _
      %p455 = scmp.le.s32.totalorder 2, %s19
      // Predicated region
      $region49: #{tpu_custom_call.1} parent=5 // pred_check
        %p456 = pneg %p455
      $region50: #{tpu_custom_call.1} parent=5 // pred_check_branch
        %458 = sbr.rel (%p456) target = $region52
      $region51: #{tpu_custom_call.1} parent=5 // pred_region
        %s459 = ssub.s32 %s19, 2
        // Predicated region
        $region53: #{tpu_custom_call.1} parent=51 // pred_check
          %p460 = pneg %p164
        $region54: #{tpu_custom_call.1} parent=51 // pred_check_branch
          %462 = sbr.rel (%p460) target = $region56
        $region55: #{tpu_custom_call.1} parent=51 // pred_region
          %s463 = sand.u32 %s149, 1
          %s464 = scalar_lea.sflag [#allocation4], %s463
          %s465 = sand.u32 %s149, 1
          %s466 = smul.addr %s465, 8
          %s467 = scalar_lea.vmem [#allocation7], %s466
          %468 = dma.done %s464, 128
        $region56: #{tpu_custom_call.1} parent=51 // pred_fallthru
          _
      $region52: #{tpu_custom_call.1} parent=5 // pred_fallthru
        _
    $region6: #{tpu_custom_call.1} parent=1 // loop_footer
      %s23 = sadd.s32 1, %s19
    $region7: #{tpu_custom_call.1} parent=1 // loop_footer_branch
      %18 = sbr.rel target = $region3
    $region8: #{tpu_custom_call.1} parent=1 // loop_exit
      _
    %469 = vsyncpa [#allocation3], 1
    %s470 = scalar_lea.sflag [#allocation3], 1
    %471 = vsyncpa %s470, 1
    %472 = vsyncpa [#allocation6], 1
    %s473 = scalar_lea.sflag [#allocation6], 1
    %474 = vsyncpa %s473, 1
    %475 = vsyncpa [#allocation4], 1
    %s476 = scalar_lea.sflag [#allocation4], 1
    %477 = vsyncpa %s476, 1

</llo_original>
